<compile_context>
chip_gen: v5e
topology: v5e:2x2
jax: 0.10.0
libtpu: 0.0.40
codegen_flags: <defaults>
</compile_context>

<pallas_src>
import jax
import jax.numpy as jnp
from jax.experimental import pallas as pl
from jax.experimental.pallas import tpu as pltpu


def mlp_kernel(x_ref, w1_ref, b1_ref, w2_ref, b2_ref, w3_ref, b3_ref, o_ref):
    # x_ref: (TR, 128) f32 packed rows = 8 samples x 16 features each.
    # f32 -> bf16 cast happens here (cheap VPU work, hidden under the input DMA)
    # instead of in a separate wrapper HBM pass.
    x = x_ref[...].astype(w1_ref.dtype)
    # Layer 1: (TR,128) @ (128,256) block-diag -> f32 acc, bias + ReLU in f32.
    h1 = jnp.dot(x, w1_ref[...], preferred_element_type=jnp.float32)
    h1 = jnp.maximum(h1 + b1_ref[...], 0.0)
    # Layer 2: (TR,256) @ (256,64) block-diag.
    h2 = jnp.dot(h1.astype(w2_ref.dtype), w2_ref[...],
                 preferred_element_type=jnp.float32)
    h2 = jnp.maximum(h2 + b2_ref[...], 0.0)
    # Layer 3: (TR,64) @ (64,16) block-diag.
    out = jnp.dot(h2.astype(w3_ref.dtype), w3_ref[...],
                  preferred_element_type=jnp.float32)
    o_ref[...] = (out + b3_ref[...]).astype(o_ref.dtype)


def pack_params(params, *, compute_dtype=jnp.bfloat16, pack=8):
    """One-time packing of the Linear params for the kernel (call once at init).

    Weights (stored (in, out)) are replicated block-diagonally `pack` times so a
    128-lane packed activation row (= `pack` samples x 16 features, row-major)
    flows through every layer as one lane-dense matmul; biases are lane-tiled to
    match.  Hoisted out of the forward path so its ~6 small XLA ops run once.
    """
    eye = jnp.eye(pack, dtype=jnp.float32)
    return {
        "w1": jnp.kron(eye, params["w1"]).astype(compute_dtype),      # (128, 256)
        "w2": jnp.kron(eye, params["w2"]).astype(compute_dtype),      # (256,  64)
        "w3": jnp.kron(eye, params["w3"]).astype(compute_dtype),      # ( 64,  16)
        "b1": jnp.tile(params["b1"], (1, pack)).astype(jnp.float32),  # (1, 256)
        "b2": jnp.tile(params["b2"], (1, pack)).astype(jnp.float32),  # (1,  64)
        "b3": jnp.tile(params["b3"], (1, pack)).astype(jnp.float32),  # (1,  16)
        "out_features": params["w3"].shape[1],
    }


def simple_mlp(x, packed, *, block_rows=2048):
    """x: (B, 16) float32.  packed: output of pack_params()."""
    assert block_rows % 8 == 0
    assert x.dtype == jnp.float32
    B, F = x.shape
    PACK = 128 // F                     # 8 samples per 128-lane packed row
    out_f = packed["out_features"]      # 2

    w1, b1 = packed["w1"], packed["b1"]
    w2, b2 = packed["w2"], packed["b2"]
    w3, b3 = packed["w3"], packed["b3"]

    # Pack activations: (B,16) f32 -> (R,128) f32.  Row-major reshape is free
    # (no copy); bf16 cast happens inside the kernel.  Pad only when needed.
    R = pl.cdiv(B, PACK)
    # Aim for >= 2 grid steps (pipelining + v7x dual-TensorCore sharding) while
    # keeping TR a multiple of 8 (f32 sublane tile) and capped at block_rows.
    TR = min(block_rows, max(8, 8 * pl.cdiv(pl.cdiv(R, 2), 8)))
    num_tiles = pl.cdiv(R, TR)
    R_total = TR * num_tiles
    B_pad = R_total * PACK
    x_p = jnp.pad(x, ((0, B_pad - B), (0, 0))) if B_pad != B else x
    x_p = x_p.reshape(R_total, PACK * F)

    # Advisory cost: report what the MXU/HBM actually do (8x block-diag flops,
    # f32 input + f32 output + bf16 weight bytes).
    flops = 2 * R_total * (128 * 256 + 256 * 64 + 64 * 16)
    bytes_accessed = (
        R_total * 128 * 4                        # f32 packed input
        + R_total * PACK * out_f * 4             # f32 packed output
        + (128 * 256 + 256 * 64 + 64 * 16) * 2   # bf16 block-diag weights
        + (256 + 64 + 16) * 4                    # f32 biases
    )

    wspec = lambda a: pl.BlockSpec(a.shape, lambda i: (0, 0))  # VMEM-resident

    out_p = pl.pallas_call(
        mlp_kernel,
        out_shape=jax.ShapeDtypeStruct((R_total, PACK * out_f), jnp.float32),
        grid=(num_tiles,),
        in_specs=[
            pl.BlockSpec((TR, PACK * F), lambda i: (i, 0)),
            wspec(w1), wspec(b1),
            wspec(w2), wspec(b2),
            wspec(w3), wspec(b3),
        ],
        out_specs=pl.BlockSpec((TR, PACK * out_f), lambda i: (i, 0)),
        compiler_params=pltpu.CompilerParams(
            dimension_semantics=("parallel",),
            vmem_limit_bytes=32 * 1024 * 1024,
        ),
        cost_estimate=pl.CostEstimate(
            flops=flops, transcendentals=0, bytes_accessed=bytes_accessed),
    )(x_p, w1, b1, w2, b2, w3, b3)

    # (R_total,16) -> (B_pad,2) is the identical row-major layout; drop padding.
    return out_p.reshape(B_pad, out_f)[:B]


def init_params(key):
    """PyTorch-Linear-like init. Weights stored (in,out); biases (1,out)."""
    dims = [(16, 32), (32, 8), (8, 2)]
    params = {}
    keys = jax.random.split(key, 2 * len(dims))
    for i, (fan_in, fan_out) in enumerate(dims):
        bound = 1.0 / (fan_in ** 0.5)
        params[f"w{i + 1}"] = jax.random.uniform(
            keys[2 * i], (fan_in, fan_out), minval=-bound, maxval=bound,
            dtype=jnp.float32)
        params[f"b{i + 1}"] = jax.random.uniform(
            keys[2 * i + 1], (1, fan_out), minval=-bound, maxval=bound,
            dtype=jnp.float32)
    return params


def reference_mlp(x, params):
    """Pure-JAX reference matching the kernel's bf16-weight / f32-accum numerics."""
    bf = jnp.bfloat16
    h = jnp.maximum(jnp.dot(x.astype(bf), params["w1"].astype(bf),
                            preferred_element_type=jnp.float32) + params["b1"], 0.0)
    h = jnp.maximum(jnp.dot(h.astype(bf), params["w2"].astype(bf),
                            preferred_element_type=jnp.float32) + params["b2"], 0.0)
    return jnp.dot(h.astype(bf), params["w3"].astype(bf),
                   preferred_element_type=jnp.float32) + params["b3"]


if __name__ == "__main__":
    key = jax.random.PRNGKey(0)
    pkey, xkey1, xkey2 = jax.random.split(key, 3)
    params = init_params(pkey)
    packed = pack_params(params)   # one-time packing, hoisted off the call path

    # Test 1: batch divisible by 8 (no padding copy), small single-tile grid.
    x1 = jax.random.normal(xkey1, (64, 16), dtype=jnp.float32)
    out1 = jax.block_until_ready(simple_mlp(x1, packed))
    ref1 = reference_mlp(x1, params)
    assert out1.shape == (64, 2), out1.shape
    assert jnp.allclose(out1, ref1, atol=1e-2, rtol=1e-2), "mismatch vs reference (test 1)"

    # Test 2: ragged batch (padding path) + multi-tile pipelined grid.
    x2 = jax.random.normal(xkey2, (200, 16), dtype=jnp.float32)
    out2 = jax.block_until_ready(simple_mlp(x2, packed))
    ref2 = reference_mlp(x2, params)
    assert out2.shape == (200, 2), out2.shape
    assert jnp.allclose(out2, ref2, atol=1e-2, rtol=1e-2), "mismatch vs reference (test 2)"

    print("KERNEL_OK")
</pallas_src>

<mosaic_0001>
module attributes {stable_mosaic.version = 11 : i64} {
  func.func @mlp_kernel(%arg0: i32, %arg1: memref<8x128xf32, #tpu.memory_space<vmem>>, %arg2: memref<128x256xbf16, #tpu.memory_space<vmem>>, %arg3: memref<1x256xf32, #tpu.memory_space<vmem>>, %arg4: memref<256x64xbf16, #tpu.memory_space<vmem>>, %arg5: memref<1x64xf32, #tpu.memory_space<vmem>>, %arg6: memref<64x16xbf16, #tpu.memory_space<vmem>>, %arg7: memref<1x16xf32, #tpu.memory_space<vmem>>, %arg8: memref<8x16xf32, #tpu.memory_space<vmem>>) attributes {dimension_semantics = [#tpu.dimension_semantics<parallel>], iteration_bounds = array<i64: 1>, scalar_prefetch = 0 : i64, scratch_operands = 0 : i64, tpu.core_type = #tpu.core_type<tc>, window_params = [{transform_indices = @transform_0, window_bounds = array<i64: 8, 128>}, {pipeline_mode = #tpu.pipeline_mode<synchronous>, transform_indices = @transform_1, window_bounds = array<i64: 128, 256>}, {pipeline_mode = #tpu.pipeline_mode<synchronous>, transform_indices = @transform_2, window_bounds = array<i64: 1, 256>}, {pipeline_mode = #tpu.pipeline_mode<synchronous>, transform_indices = @transform_3, window_bounds = array<i64: 256, 64>}, {pipeline_mode = #tpu.pipeline_mode<synchronous>, transform_indices = @transform_4, window_bounds = array<i64: 1, 64>}, {pipeline_mode = #tpu.pipeline_mode<synchronous>, transform_indices = @transform_5, window_bounds = array<i64: 64, 16>}, {pipeline_mode = #tpu.pipeline_mode<synchronous>, transform_indices = @transform_6, window_bounds = array<i64: 1, 16>}, {transform_indices = @transform_7, window_bounds = array<i64: 8, 16>}]} {
    %c0 = arith.constant 0 : index
    %c0_0 = arith.constant 0 : index
    %0 = vector.load %arg1[%c0, %c0_0] : memref<8x128xf32, #tpu.memory_space<vmem>>, vector<8x128xf32>
    %1 = arith.truncf %0 : vector<8x128xf32> to vector<8x128xbf16>
    %c0_1 = arith.constant 0 : index
    %c0_2 = arith.constant 0 : index
    %2 = vector.load %arg2[%c0_1, %c0_2] : memref<128x256xbf16, #tpu.memory_space<vmem>>, vector<128x256xbf16>
    %cst = arith.constant dense<0.000000e+00> : vector<8x256xf32>
    %3 = tpu.matmul %1, %2, %cst {dimension_numbers = #tpu.dot_dimension_numbers<[1], [0], [0], [1], [0, 0, 1, 1], [], []>} : vector<8x128xbf16>, vector<128x256xbf16>, vector<8x256xf32> -> vector<8x256xf32>
    %c0_3 = arith.constant 0 : index
    %c0_4 = arith.constant 0 : index
    %4 = vector.load %arg3[%c0_3, %c0_4] : memref<1x256xf32, #tpu.memory_space<vmem>>, vector<1x256xf32>
    %5 = vector.broadcast %4 : vector<1x256xf32> to vector<8x256xf32>
    %6 = arith.addf %3, %5 : vector<8x256xf32>
    %cst_5 = arith.constant 0.000000e+00 : f32
    %7 = vector.broadcast %cst_5 : f32 to vector<8x256xf32>
    %8 = arith.maximumf %6, %7 : vector<8x256xf32>
    %9 = arith.truncf %8 : vector<8x256xf32> to vector<8x256xbf16>
    %c0_6 = arith.constant 0 : index
    %c0_7 = arith.constant 0 : index
    %10 = vector.load %arg4[%c0_6, %c0_7] : memref<256x64xbf16, #tpu.memory_space<vmem>>, vector<256x64xbf16>
    %cst_8 = arith.constant dense<0.000000e+00> : vector<8x64xf32>
    %11 = tpu.matmul %9, %10, %cst_8 {dimension_numbers = #tpu.dot_dimension_numbers<[1], [0], [0], [1], [0, 0, 1, 1], [], []>} : vector<8x256xbf16>, vector<256x64xbf16>, vector<8x64xf32> -> vector<8x64xf32>
    %c0_9 = arith.constant 0 : index
    %c0_10 = arith.constant 0 : index
    %12 = vector.load %arg5[%c0_9, %c0_10] : memref<1x64xf32, #tpu.memory_space<vmem>>, vector<1x64xf32>
    %13 = vector.broadcast %12 : vector<1x64xf32> to vector<8x64xf32>
    %14 = arith.addf %11, %13 : vector<8x64xf32>
    %cst_11 = arith.constant 0.000000e+00 : f32
    %15 = vector.broadcast %cst_11 : f32 to vector<8x64xf32>
    %16 = arith.maximumf %14, %15 : vector<8x64xf32>
    %17 = arith.truncf %16 : vector<8x64xf32> to vector<8x64xbf16>
    %c0_12 = arith.constant 0 : index
    %c0_13 = arith.constant 0 : index
    %18 = vector.load %arg6[%c0_12, %c0_13] : memref<64x16xbf16, #tpu.memory_space<vmem>>, vector<64x16xbf16>
    %cst_14 = arith.constant dense<0.000000e+00> : vector<8x16xf32>
    %19 = tpu.matmul %17, %18, %cst_14 {dimension_numbers = #tpu.dot_dimension_numbers<[1], [0], [0], [1], [0, 0, 1, 1], [], []>} : vector<8x64xbf16>, vector<64x16xbf16>, vector<8x16xf32> -> vector<8x16xf32>
    %c0_15 = arith.constant 0 : index
    %c0_16 = arith.constant 0 : index
    %20 = vector.load %arg7[%c0_15, %c0_16] : memref<1x16xf32, #tpu.memory_space<vmem>>, vector<1x16xf32>
    %21 = vector.broadcast %20 : vector<1x16xf32> to vector<8x16xf32>
    %22 = arith.addf %19, %21 : vector<8x16xf32>
    %c0_17 = arith.constant 0 : index
    %c0_18 = arith.constant 0 : index
    %23 = vector.load %arg8[%c0_17, %c0_18] : memref<8x16xf32, #tpu.memory_space<vmem>>, vector<8x16xf32>
    tpu.vector_store %arg8[%c0_17, %c0_18], %22 {strides = array<i32>} : memref<8x16xf32, #tpu.memory_space<vmem>>, vector<8x16xf32>,
    return
  }
  func.func @transform_0(%arg0: i32) -> (i32, i32) {
    %c0_i32 = arith.constant 0 : i32
    %c0_i32_0 = arith.constant 0 : i32
    return %arg0, %c0_i32 : i32, i32
  }
  func.func @transform_1(%arg0: i32) -> (i32, i32) {
    %c0_i32 = arith.constant 0 : i32
    %c0_i32_0 = arith.constant 0 : i32
    %c0_i32_1 = arith.constant 0 : i32
    return %c0_i32, %c0_i32_0 : i32, i32
  }
  func.func @transform_2(%arg0: i32) -> (i32, i32) {
    %c0_i32 = arith.constant 0 : i32
    %c0_i32_0 = arith.constant 0 : i32
    %c0_i32_1 = arith.constant 0 : i32
    return %c0_i32, %c0_i32_0 : i32, i32
  }
  func.func @transform_3(%arg0: i32) -> (i32, i32) {
    %c0_i32 = arith.constant 0 : i32
    %c0_i32_0 = arith.constant 0 : i32
    %c0_i32_1 = arith.constant 0 : i32
    return %c0_i32, %c0_i32_0 : i32, i32
  }
  func.func @transform_4(%arg0: i32) -> (i32, i32) {
    %c0_i32 = arith.constant 0 : i32
    %c0_i32_0 = arith.constant 0 : i32
    %c0_i32_1 = arith.constant 0 : i32
    return %c0_i32, %c0_i32_0 : i32, i32
  }
  func.func @transform_5(%arg0: i32) -> (i32, i32) {
    %c0_i32 = arith.constant 0 : i32
    %c0_i32_0 = arith.constant 0 : i32
    %c0_i32_1 = arith.constant 0 : i32
    return %c0_i32, %c0_i32_0 : i32, i32
  }
  func.func @transform_6(%arg0: i32) -> (i32, i32) {
    %c0_i32 = arith.constant 0 : i32
    %c0_i32_0 = arith.constant 0 : i32
    %c0_i32_1 = arith.constant 0 : i32
    return %c0_i32, %c0_i32_0 : i32, i32
  }
  func.func @transform_7(%arg0: i32) -> (i32, i32) {
    %c0_i32 = arith.constant 0 : i32
    %c0_i32_0 = arith.constant 0 : i32
    return %arg0, %c0_i32 : i32, i32
  }
}

</mosaic_0001>

<llo_original>
// kernel: tpu_custom_call.1
$region0: #{tpu_custom_call.1}
  #allocation0 [shape = 'u32[]', space=smem, size = 0x4, offset = 0x4, fixed_abs, tag = 'smem constant byte address 0x4 - core index']
  #allocation1 [shape = 'u32[72,128]{1,0:T(1,128)}', space=vmem, size = 0x9000, scoped, tag = 'internal scratch']
  %s0 = inlined_call_operand.vmem [shape: f32[8,128], index: 0, kind: input, shape index: {}]
  %s1 = inlined_call_operand.vmem [shape: bf16[128,256], index: 1, kind: input, shape index: {}]
  %s2 = inlined_call_operand.vmem [shape: f32[1,256], index: 2, kind: input, shape index: {}]
  %s3 = inlined_call_operand.vmem [shape: bf16[256,64], index: 3, kind: input, shape index: {}]
  %s4 = inlined_call_operand.vmem [shape: f32[1,64], index: 4, kind: input, shape index: {}]
  %s5 = inlined_call_operand.vmem [shape: bf16[64,16], index: 5, kind: input, shape index: {}]
  %s6 = inlined_call_operand.vmem [shape: f32[1,16], index: 6, kind: input, shape index: {}]
  %s7 = inlined_call_operand.hbm [shape: f32[8,16], index: 7, kind: output, shape index: {}]
  %s8 = sld [smem:[#allocation0]]
  $region38: #{tpu_custom_call.1} parent=0
    _
  %s10 = ssub.s32 1, %s8
  %s11 = scalar_select 0, %s10, %s8
  $region1: #{tpu_custom_call.1} parent=0
    #allocation2 [shape = 'u8[4096]{0}', space=vmem, size = 0x1000, scoped, tag = 'output window, operand 0, single buffered']
    #allocation3 [shape = 's32[1]{0}', space=sflag, size = 0x4, scoped, tag = 'scoped memory for tpu_custom_call.1']
    %12 = vsyncpa [#allocation3], 0
    // Predicated region
    $region2: #{tpu_custom_call.1} parent=1 // pred_check
      _
    $region3: #{tpu_custom_call.1} parent=1 // pred_check_branch
      %14 = sbr.rel (0) target = $region5
    $region4: #{tpu_custom_call.1} parent=1 // pred_region
      _
    $region5: #{tpu_custom_call.1} parent=1 // pred_fallthru
      _
    // Predicated region
    $region6: #{tpu_custom_call.1} parent=1 // pred_check
      _
    $region7: #{tpu_custom_call.1} parent=1 // pred_check_branch
      %16 = sbr.rel (0) target = $region9
    $region8: #{tpu_custom_call.1} parent=1 // pred_region
      _
    $region9: #{tpu_custom_call.1} parent=1 // pred_fallthru
      _
    // Predicated region
    $region10: #{tpu_custom_call.1} parent=1 // pred_check
      _
    $region11: #{tpu_custom_call.1} parent=1 // pred_check_branch
      %18 = sbr.rel (0) target = $region13
    $region12: #{tpu_custom_call.1} parent=1 // pred_region
      _
    $region13: #{tpu_custom_call.1} parent=1 // pred_fallthru
      _
    // Predicated region
    $region14: #{tpu_custom_call.1} parent=1 // pred_check
      _
    $region15: #{tpu_custom_call.1} parent=1 // pred_check_branch
      %20 = sbr.rel (0) target = $region17
    $region16: #{tpu_custom_call.1} parent=1 // pred_region
      _
    $region17: #{tpu_custom_call.1} parent=1 // pred_fallthru
      _
    // Predicated region
    $region18: #{tpu_custom_call.1} parent=1 // pred_check
      _
    $region19: #{tpu_custom_call.1} parent=1 // pred_check_branch
      %22 = sbr.rel (0) target = $region21
    $region20: #{tpu_custom_call.1} parent=1 // pred_region
      _
    $region21: #{tpu_custom_call.1} parent=1 // pred_fallthru
      _
    // Predicated region
    $region22: #{tpu_custom_call.1} parent=1 // pred_check
      _
    $region23: #{tpu_custom_call.1} parent=1 // pred_check_branch
      %24 = sbr.rel (0) target = $region25
    $region24: #{tpu_custom_call.1} parent=1 // pred_region
      _
    $region25: #{tpu_custom_call.1} parent=1 // pred_fallthru
      _
    // Predicated region
    $region26: #{tpu_custom_call.1} parent=1 // pred_check
      _
    $region27: #{tpu_custom_call.1} parent=1 // pred_check_branch
      %26 = sbr.rel (0) target = $region29
    $region28: #{tpu_custom_call.1} parent=1 // pred_region
      _
    $region29: #{tpu_custom_call.1} parent=1 // pred_fallthru
      _
    %v28 = vld [vmem:[%s0] sm:$0xff]
    %v29 = vpack.c.bf16 %v28, %v28
    %v30 = vld [vmem:[%s1] sm:$0xff]
    %v31 = vld [vmem:[%s1 + $0x8] sm:$0xff]
    %v32 = vld [vmem:[%s1 + $0x10] sm:$0xff]
    %v33 = vld [vmem:[%s1 + $0x18] sm:$0xff]
    %v34 = vld [vmem:[%s1 + $0x20] sm:$0xff]
    %v35 = vld [vmem:[%s1 + $0x28] sm:$0xff]
    %v36 = vld [vmem:[%s1 + $0x30] sm:$0xff]
    %v37 = vld [vmem:[%s1 + $0x38] sm:$0xff]
    %v38 = vld [vmem:[%s1 + $0x40] sm:$0xff]
    %v39 = vld [vmem:[%s1 + $0x48] sm:$0xff]
    %v40 = vld [vmem:[%s1 + $0x50] sm:$0xff]
    %v41 = vld [vmem:[%s1 + $0x58] sm:$0xff]
    %v42 = vld [vmem:[%s1 + $0x60] sm:$0xff]
    %v43 = vld [vmem:[%s1 + $0x68] sm:$0xff]
    %v44 = vld [vmem:[%s1 + $0x70] sm:$0xff]
    %v45 = vld [vmem:[%s1 + $0x78] sm:$0xff]
    %v46 = vld [vmem:[%s2] sm:$0x3]
    %v48 = vperm.slane %v46, 0
    %v49 = vperm.slane %v46, 1
    %v68 = vunpack.c.l.b16 %v30
    %v69 = vunpack.c.h.b16 %v30
    %v70 = vunpack.c.l.b16 %v31
    %v71 = vunpack.c.h.b16 %v31
    %v72 = vunpack.c.l.b16 %v32
    %v73 = vunpack.c.h.b16 %v32
    %v74 = vunpack.c.l.b16 %v33
    %v75 = vunpack.c.h.b16 %v33
    %v76 = vunpack.c.l.b16 %v34
    %v77 = vunpack.c.h.b16 %v34
    %v78 = vunpack.c.l.b16 %v35
    %v79 = vunpack.c.h.b16 %v35
    %v80 = vunpack.c.l.b16 %v36
    %v81 = vunpack.c.h.b16 %v36
    %v82 = vunpack.c.l.b16 %v37
    %v83 = vunpack.c.h.b16 %v37
    %v84 = vunpack.c.l.b16 %v38
    %v85 = vunpack.c.h.b16 %v38
    %v86 = vunpack.c.l.b16 %v39
    %v87 = vunpack.c.h.b16 %v39
    %v88 = vunpack.c.l.b16 %v40
    %v89 = vunpack.c.h.b16 %v40
    %v90 = vunpack.c.l.b16 %v41
    %v91 = vunpack.c.h.b16 %v41
    %v92 = vunpack.c.l.b16 %v42
    %v93 = vunpack.c.h.b16 %v42
    %v94 = vunpack.c.l.b16 %v43
    %v95 = vunpack.c.h.b16 %v43
    %v96 = vunpack.c.l.b16 %v44
    %v97 = vunpack.c.h.b16 %v44
    %v98 = vunpack.c.l.b16 %v45
    %v99 = vunpack.c.h.b16 %v45
    %v100 = vpack.c.b16 %v70, %v68
    %v101 = vpack.c.b16 %v71, %v69
    %v102 = vpack.c.b16 %v74, %v72
    %v103 = vpack.c.b16 %v75, %v73
    %v104 = vpack.c.b16 %v78, %v76
    %v105 = vpack.c.b16 %v79, %v77
    %v106 = vpack.c.b16 %v82, %v80
    %v107 = vpack.c.b16 %v83, %v81
    %v108 = vpack.c.b16 %v86, %v84
    %v109 = vpack.c.b16 %v87, %v85
    %v110 = vpack.c.b16 %v90, %v88
    %v111 = vpack.c.b16 %v91, %v89
    %v112 = vpack.c.b16 %v94, %v92
    %v113 = vpack.c.b16 %v95, %v93
    %v114 = vpack.c.b16 %v98, %v96
    %v115 = vpack.c.b16 %v99, %v97
    %132 = vmatpush.bf16.msra.mxu0 %v114
    %133 = vmatpush.bf16.msra.mxu0 %v112
    %134 = vmatpush.bf16.msra.mxu0 %v110
    %135 = vmatpush.bf16.msra.mxu0 %v108
    %136 = vmatpush.bf16.msra.mxu0 %v106
    %137 = vmatpush.bf16.msra.mxu0 %v104
    %138 = vmatpush.bf16.msra.mxu0 %v102
    %139 = vmatpush.bf16.msra.mxu0 %v100
    %140 = vmatmul.bf16.gmra.mxu0 %v29
    %v141 = vpop.f32.mrf.mxu0
    %v142 = vadd.f32 %v48, %v141
    %v143 = vpop.f32.mrf.mxu0
    %144 = vdwg.mxu0
    %145 = vmatpush.bf16.msra.mxu0 %v115
    %146 = vmatpush.bf16.msra.mxu0 %v113
    %147 = vmatpush.bf16.msra.mxu0 %v111
    %148 = vmatpush.bf16.msra.mxu0 %v109
    %149 = vmatpush.bf16.msra.mxu0 %v107
    %150 = vmatpush.bf16.msra.mxu0 %v105
    %151 = vmatpush.bf16.msra.mxu0 %v103
    %152 = vmatpush.bf16.msra.mxu0 %v101
    %153 = vmatmul.bf16.gmra.mxu0 %v29
    %v154 = vpop.f32.mrf.mxu0
    %v155 = vadd.f32 %v49, %v154
    %v156 = vpop.f32.mrf.mxu0
    %157 = vdwg.mxu0
    %v158 = vmax.f32 %v142, 0.0
    %v159 = vmax.f32 %v155, 0.0
    %v160 = vpack.c.bf16 %v158, %v158
    %v161 = vpack.c.bf16 %v159, %v159
    %v162 = vld [vmem:[%s3] sm:$0xf]
    %v163 = vld [vmem:[%s3 + $0x4] sm:$0xf]
    %v164 = vld [vmem:[%s3 + $0x8] sm:$0xf]
    %v165 = vld [vmem:[%s3 + $0xc] sm:$0xf]
    %v166 = vld [vmem:[%s3 + $0x10] sm:$0xf]
    %v167 = vld [vmem:[%s3 + $0x14] sm:$0xf]
    %v168 = vld [vmem:[%s3 + $0x18] sm:$0xf]
    %v169 = vld [vmem:[%s3 + $0x1c] sm:$0xf]
    %v170 = vld [vmem:[%s3 + $0x20] sm:$0xf]
    %v171 = vld [vmem:[%s3 + $0x24] sm:$0xf]
    %v172 = vld [vmem:[%s3 + $0x28] sm:$0xf]
    %v173 = vld [vmem:[%s3 + $0x2c] sm:$0xf]
    %v174 = vld [vmem:[%s3 + $0x30] sm:$0xf]
    %v175 = vld [vmem:[%s3 + $0x34] sm:$0xf]
    %v176 = vld [vmem:[%s3 + $0x38] sm:$0xf]
    %v177 = vld [vmem:[%s3 + $0x3c] sm:$0xf]
    %v178 = vld [vmem:[%s3 + $0x40] sm:$0xf]
    %v179 = vld [vmem:[%s3 + $0x44] sm:$0xf]
    %v180 = vld [vmem:[%s3 + $0x48] sm:$0xf]
    %v181 = vld [vmem:[%s3 + $0x4c] sm:$0xf]
    %v182 = vld [vmem:[%s3 + $0x50] sm:$0xf]
    %v183 = vld [vmem:[%s3 + $0x54] sm:$0xf]
    %v184 = vld [vmem:[%s3 + $0x58] sm:$0xf]
    %v185 = vld [vmem:[%s3 + $0x5c] sm:$0xf]
    %v186 = vld [vmem:[%s3 + $0x60] sm:$0xf]
    %v187 = vld [vmem:[%s3 + $0x64] sm:$0xf]
    %v188 = vld [vmem:[%s3 + $0x68] sm:$0xf]
    %v189 = vld [vmem:[%s3 + $0x6c] sm:$0xf]
    %v190 = vld [vmem:[%s3 + $0x70] sm:$0xf]
    %v191 = vld [vmem:[%s3 + $0x74] sm:$0xf]
    %v192 = vld [vmem:[%s3 + $0x78] sm:$0xf]
    %v193 = vld [vmem:[%s3 + $0x7c] sm:$0xf]
    %v194 = vld [vmem:[%s4] sm:$0x1]
    %v196 = vperm.slane %v194, 0
    %v230 = vunpack.c.l.b16 %v162
    %v231 = vunpack.c.l.b16 %v163
    %v232 = vunpack.c.l.b16 %v164
    %v233 = vunpack.c.l.b16 %v165
    %v234 = vunpack.c.l.b16 %v166
    %v235 = vunpack.c.l.b16 %v167
    %v236 = vunpack.c.l.b16 %v168
    %v237 = vunpack.c.l.b16 %v169
    %v238 = vunpack.c.l.b16 %v170
    %v239 = vunpack.c.l.b16 %v171
    %v240 = vunpack.c.l.b16 %v172
    %v241 = vunpack.c.l.b16 %v173
    %v242 = vunpack.c.l.b16 %v174
    %v243 = vunpack.c.l.b16 %v175
    %v244 = vunpack.c.l.b16 %v176
    %v245 = vunpack.c.l.b16 %v177
    %v246 = vunpack.c.l.b16 %v178
    %v247 = vunpack.c.l.b16 %v179
    %v248 = vunpack.c.l.b16 %v180
    %v249 = vunpack.c.l.b16 %v181
    %v250 = vunpack.c.l.b16 %v182
    %v251 = vunpack.c.l.b16 %v183
    %v252 = vunpack.c.l.b16 %v184
    %v253 = vunpack.c.l.b16 %v185
    %v254 = vunpack.c.l.b16 %v186
    %v255 = vunpack.c.l.b16 %v187
    %v256 = vunpack.c.l.b16 %v188
    %v257 = vunpack.c.l.b16 %v189
    %v258 = vunpack.c.l.b16 %v190
    %v259 = vunpack.c.l.b16 %v191
    %v260 = vunpack.c.l.b16 %v192
    %v261 = vunpack.c.l.b16 %v193
    %v262 = vpack.c.b16 %v231, %v230
    %v263 = vpack.c.b16 %v233, %v232
    %v264 = vpack.c.b16 %v235, %v234
    %v265 = vpack.c.b16 %v237, %v236
    %v266 = vpack.c.b16 %v239, %v238
    %v267 = vpack.c.b16 %v241, %v240
    %v268 = vpack.c.b16 %v243, %v242
    %v269 = vpack.c.b16 %v245, %v244
    %v270 = vpack.c.b16 %v247, %v246
    %v271 = vpack.c.b16 %v249, %v248
    %v272 = vpack.c.b16 %v251, %v250
    %v273 = vpack.c.b16 %v253, %v252
    %v274 = vpack.c.b16 %v255, %v254
    %v275 = vpack.c.b16 %v257, %v256
    %v276 = vpack.c.b16 %v259, %v258
    %v277 = vpack.c.b16 %v261, %v260
    %294 = vmatpush.bf16.msra.mxu0 %v269
    %295 = vmatpush.bf16.msra.mxu0 %v268
    %296 = vmatpush.bf16.msra.mxu0 %v267
    %297 = vmatpush.bf16.msra.mxu0 %v266
    %298 = vmatpush.bf16.msra.mxu0 %v265
    %299 = vmatpush.bf16.msra.mxu0 %v264
    %300 = vmatpush.bf16.msra.mxu0 %v263
    %301 = vmatpush.bf16.msra.mxu0 %v262
    %302 = vmatmul.bf16.gmra.mxu0 %v160
    %v303 = vpop.f32.mrf.mxu0
    %v304 = vadd.f32 %v196, %v303
    %v305 = vpop.f32.mrf.mxu0
    %306 = vdwg.mxu0
    %307 = vmatpush.bf16.msra.mxu0 %v277
    %308 = vmatpush.bf16.msra.mxu0 %v276
    %309 = vmatpush.bf16.msra.mxu0 %v275
    %310 = vmatpush.bf16.msra.mxu0 %v274
    %311 = vmatpush.bf16.msra.mxu0 %v273
    %312 = vmatpush.bf16.msra.mxu0 %v272
    %313 = vmatpush.bf16.msra.mxu0 %v271
    %314 = vmatpush.bf16.msra.mxu0 %v270
    %315 = vmatmul.bf16.gmra.mxu0 %v161
    %v316 = vpop.f32.mrf.mxu0
    %v317 = vadd.f32 %v304, %v316
    %v318 = vpop.f32.mrf.mxu0
    %319 = vdwg.mxu0
    %v320 = vmax.f32 %v317, 0.0
    %v321 = vpack.c.bf16 %v320, %v320
    %v322 = vld [vmem:[%s5] sm:$0xf]
    %v323 = vld [vmem:[%s5 + $0x4] sm:$0xf]
    %v324 = vld [vmem:[%s5 + $0x8] sm:$0xf]
    %v325 = vld [vmem:[%s5 + $0xc] sm:$0xf]
    %v326 = vld [vmem:[%s5 + $0x10] sm:$0xf]
    %v327 = vld [vmem:[%s5 + $0x14] sm:$0xf]
    %v328 = vld [vmem:[%s5 + $0x18] sm:$0xf]
    %v329 = vld [vmem:[%s5 + $0x1c] sm:$0xf]
    %v330 = vld [vmem:[%s6] sm:$0x1]
    %v332 = vperm.slane %v330, 0
    %v342 = vunpack.c.l.b16 %v322
    %v343 = vunpack.c.l.b16 %v323
    %v344 = vunpack.c.l.b16 %v324
    %v345 = vunpack.c.l.b16 %v325
    %v346 = vunpack.c.l.b16 %v326
    %v347 = vunpack.c.l.b16 %v327
    %v348 = vunpack.c.l.b16 %v328
    %v349 = vunpack.c.l.b16 %v329
    %v350 = vpack.c.b16 %v343, %v342
    %v351 = vpack.c.b16 %v345, %v344
    %v352 = vpack.c.b16 %v347, %v346
    %v353 = vpack.c.b16 %v349, %v348
    %vm358 = vcmask 523264
    %v360 = vsel %vm358, %v321, 0
    %362 = vmatpush.bf16.msra.mxu0 0
    %363 = vmatpush.bf16.msra.mxu0 0
    %364 = vmatpush.bf16.msra.mxu0 0
    %365 = vmatpush.bf16.msra.mxu0 0
    %366 = vmatpush.bf16.msra.mxu0 %v353
    %367 = vmatpush.bf16.msra.mxu0 %v352
    %368 = vmatpush.bf16.msra.mxu0 %v351
    %369 = vmatpush.bf16.msra.mxu0 %v350
    %370 = vmatmul.bf16.gmra.mxu0 %v360
    %v371 = vpop.f32.mrf.mxu0
    %v372 = vadd.f32 %v332, %v371
    %v373 = vpop.f32.mrf.mxu0
    %374 = vdwg.mxu0
    %vm375 = vcmask 130048
    %376 = vst.msk [vmem:[#allocation2] sm:$0xff] %vm375, %v372
    // Predicated region
    $region30: #{tpu_custom_call.1} parent=1 // pred_check
      _
    $region31: #{tpu_custom_call.1} parent=1 // pred_check_branch
      %378 = sbr.rel (0) target = $region33
    $region32: #{tpu_custom_call.1} parent=1 // pred_region
      %380 = vsyncadd [#allocation3], 0
      %s382 = sshll.u32 [#allocation2], 4
      %s383 = int_to_ptr.vmem [resolvable:$true] %s382
      %s384 = sshll.u32 %s7, 4
      %s385 = int_to_ptr.hbm [resolvable:$true] %s384
      %387 = dma.vmem_to_hbm [thread:$0]  %s383, 128, %s385, [#allocation3]
    $region33: #{tpu_custom_call.1} parent=1 // pred_fallthru
      _
    // Predicated region
    $region34: #{tpu_custom_call.1} parent=1 // pred_check
      _
    $region35: #{tpu_custom_call.1} parent=1 // pred_check_branch
      %389 = sbr.rel (0) target = $region37
    $region36: #{tpu_custom_call.1} parent=1 // pred_region
      %391 = dma.done [#allocation3], 128
    $region37: #{tpu_custom_call.1} parent=1 // pred_fallthru
      _
    %392 = vsyncpa [#allocation3], 1

</llo_original>
